<compile_context>
chip_gen: v7x
topology: tpu7x:2x2x1
jax: 0.10.0
libtpu: 0.0.40
codegen_flags: <defaults>
</compile_context>

<pallas_src>
import functools

import jax
import jax.numpy as jnp
import numpy as np
from jax.experimental import pallas as pl
from jax.experimental.pallas import tpu as pltpu


def _round_up(v, m):
    return ((v + m - 1) // m) * m


def _device_kind():
    try:
        return jax.devices()[0].device_kind.lower()
    except Exception:
        return ""


def _tiling_config():
    """Generation-aware tile / VMEM-limit choices."""
    kind = _device_kind()
    if "v7" in kind:
        # 64 MiB VMEM per TensorCore (32 MiB scoped default), 2 TCs:
        # cap tile size, keep a >=2-step (preferably even) grid.
        return dict(target_rows=256, vmem_limit=32 * 1024 * 1024, two_cores=True)
    # v5e / v6e: 128 MiB VMEM, single TensorCore, memory-bound -> big tiles.
    return dict(target_rows=1024, vmem_limit=64 * 1024 * 1024, two_cores=False)


def _pick_block_b(B, S, per_b_bytes, fixed_bytes, *, target_rows, vmem_limit,
                  two_cores):
    """Batch-tile size: multiple of 8 (or B), divides B, fits the VMEM budget."""
    cands = sorted({tb for tb in range(8, B + 1, 8) if B % tb == 0} | {B})
    budget = max(vmem_limit - fixed_bytes - (2 << 20), per_b_bytes)
    vmem_cap = max(1, budget // per_b_bytes)
    row_cap = max(1, target_rows // max(S, 1))
    cap = min(vmem_cap, row_cap)
    feasible = [tb for tb in cands if tb <= cap]
    tb = feasible[-1] if feasible else cands[0]
    if two_cores:
        # Prefer an even grid with >=2 steps so both v7x TensorCores get work.
        even = [t for t in cands if t <= cap and B // t >= 2 and (B // t) % 2 == 0]
        two = [t for t in cands if t <= cap and B // t >= 2]
        if even:
            tb = even[-1]
        elif two:
            tb = two[-1]
    return tb


def _attflat_kernel(*refs, flat_glimpse, merge, fast):
    if merge:
        (x_ref, bias_ref, w1_ref, b1_ref, w2_ref, b2_ref,
         wm_ref, bm_ref, out_ref) = refs
    else:
        x_ref, bias_ref, w1_ref, b1_ref, w2_ref, b2_ref, out_ref = refs

    TB, S, H = x_ref.shape
    G = flat_glimpse
    mm_dtype = jnp.bfloat16 if fast else jnp.float32

    x = x_ref[...]                                   # [TB, S, H]  f32
    # S % 8 == 0 is guaranteed by the wrapper -> these reshapes are layout
    # no-ops (leading dims merge/split with the minor dim unchanged).
    x2d = x.reshape(TB * S, H)
    x2d_mm = x2d.astype(mm_dtype) if fast else x2d   # single cast of x

    # MLP: Linear -> ReLU -> Linear (dropout = identity at inference).
    # Weights arrive already in mm_dtype (pre-cast in the wrapper).
    h = jnp.dot(x2d_mm, w1_ref[...],
                preferred_element_type=jnp.float32) + b1_ref[...]
    h = jnp.maximum(h, 0.0)
    if fast:
        h = h.astype(mm_dtype)
    att = jnp.dot(h, w2_ref[...],
                  preferred_element_type=jnp.float32) + b2_ref[...]  # [TB*S, G]
    att = att.reshape(TB, S, G)

    # Additive pad-mask bias (-1e9 at padded positions), broadcast over G.
    # bias_ref is the lane-dense [TB, S] stream; the tiny expand to [TB, S, 1]
    # is a few vregs of relayout per step.
    bias = jnp.expand_dims(bias_ref[...], axis=2)    # [TB, S, 1]
    att = att + bias

    # Softmax over the sequence axis (axis=1), per batch / glimpse.
    att = att - jnp.max(att, axis=1, keepdims=True)
    e = jnp.exp(att)
    denom = jnp.sum(e, axis=1, keepdims=True)
    if fast:
        att = e * pl.reciprocal(denom, approx=True)  # EUP; off the VALU slots
    else:
        att = e / denom

    # Per-glimpse attend on the VPU/XLU (G is tiny; keeps the MXU free), then
    # either accumulate the merge matmul against static sublane slices of wm
    # or store the stacked glimpses directly.
    if merge:
        out_pad = out_ref.shape[1]
        acc = jnp.zeros((TB, out_pad), jnp.float32)
        for g in range(G):
            attd_g = jnp.sum(att[:, :, g:g + 1] * x, axis=1)     # [TB, H] f32
            if fast:
                attd_g = attd_g.astype(mm_dtype)
            acc = acc + jnp.dot(attd_g, wm_ref[g * H:(g + 1) * H, :],
                                preferred_element_type=jnp.float32)
        out_ref[...] = acc + bm_ref[...]             # lane-dense, unmasked vst
    else:
        for g in range(G):
            attd_g = jnp.sum(att[:, :, g:g + 1] * x, axis=1)     # [TB, H] f32
            out_ref[:, g:g + 1, :] = attd_g[:, None, :]


def att_flat(x, x_mask, params, *, flat_glimpse, merge=True, fast=True,
             block_b=None):
    """x: [B, S, H] float32.  x_mask: [B, 1, 1, S] bool (True = pad) or None.

    merge=True  -> [B, 2*H]    (linear_merge output)
    merge=False -> [B, G, H]   (stacked per-glimpse attended features)
    """
    B, S, H = x.shape
    G = flat_glimpse
    w1, b1, w2, b2 = params[0], params[1], params[2], params[3]
    FF = w1.shape[1]

    # --- S padding so in-kernel reshapes stay layout no-ops ---------------
    S_PAD = _round_up(max(S, 8), 8)
    if x_mask is not None:
        mask2d = x_mask.reshape(B, S)
    else:
        mask2d = jnp.zeros((B, S), dtype=bool)
    if S_PAD != S:
        mask2d = jnp.concatenate(
            [mask2d, jnp.ones((B, S_PAD - S), dtype=bool)], axis=1)
        x = jnp.pad(x, ((0, 0), (0, S_PAD - S), (0, 0)))
    # Lane-dense additive bias: [B, S_PAD] f32, 0 valid / -1e9 padded.
    bias = jnp.where(mask2d, jnp.float32(-1e9), jnp.float32(0.0))

    # --- weights: pre-cast once in the wrapper (never re-cast per step) ---
    w_dtype = jnp.bfloat16 if fast else jnp.float32
    w1_c = w1.astype(w_dtype)
    w2_c = w2.astype(w_dtype)
    b1_2d = b1.reshape(1, FF).astype(jnp.float32)
    b2_2d = b2.reshape(1, G).astype(jnp.float32)

    if merge:
        wm, bm = params[4], params[5]
        OUT = wm.shape[1]                            # 2 * H
        OUT_PAD = _round_up(OUT, 128)                # lane-dense output
        wm_p = jnp.pad(wm, ((0, 0), (0, OUT_PAD - OUT))).astype(w_dtype)
        bm_p = jnp.pad(bm, (0, OUT_PAD - OUT)).reshape(1, OUT_PAD)
        bm_p = bm_p.astype(jnp.float32)
        out_cols = OUT_PAD
    else:
        out_cols = G * max(H, 128)

    # --- batch-tile size (generation-aware, VMEM-budgeted) ----------------
    cfg = _tiling_config()
    wb = 2 if fast else 4
    fixed_bytes = H * FF * wb + FF * G * wb + FF * 4 + G * 4
    if merge:
        fixed_bytes += G * H * OUT_PAD * wb + OUT_PAD * 4
    per_b_bytes = (2 * S_PAD * H * 4            # double-buffered x
                   + 2 * max(S_PAD, 128) * 4    # double-buffered mask bias
                   + 2 * out_cols * 4)          # double-buffered output
    if block_b is not None:
        TB = block_b
        assert B % TB == 0 and (TB % 8 == 0 or TB == B), \
            "block_b must divide B and be a multiple of 8 (or equal B)"
    else:
        TB = _pick_block_b(B, S_PAD, per_b_bytes, fixed_bytes,
                           target_rows=cfg["target_rows"],
                           vmem_limit=cfg["vmem_limit"],
                           two_cores=cfg["two_cores"])

    kernel = functools.partial(_attflat_kernel, flat_glimpse=G, merge=merge,
                               fast=fast)

    in_specs = [
        pl.BlockSpec((TB, S_PAD, H), lambda b: (b, 0, 0)),     # x
        pl.BlockSpec((TB, S_PAD), lambda b: (b, 0)),           # mask bias
        pl.BlockSpec((H, FF), lambda b: (0, 0)),               # w1 (resident)
        pl.BlockSpec((1, FF), lambda b: (0, 0)),               # b1
        pl.BlockSpec((FF, G), lambda b: (0, 0)),               # w2
        pl.BlockSpec((1, G), lambda b: (0, 0)),                # b2
    ]
    args = [x, bias, w1_c, b1_2d, w2_c, b2_2d]
    if merge:
        in_specs += [pl.BlockSpec((G * H, OUT_PAD), lambda b: (0, 0)),  # wm
                     pl.BlockSpec((1, OUT_PAD), lambda b: (0, 0))]      # bm
        args += [wm_p, bm_p]
        out_shape = jax.ShapeDtypeStruct((B, OUT_PAD), jnp.float32)
        out_spec = pl.BlockSpec((TB, OUT_PAD), lambda b: (b, 0))
    else:
        out_shape = jax.ShapeDtypeStruct((B, G, H), jnp.float32)
        out_spec = pl.BlockSpec((TB, G, H), lambda b: (b, 0, 0))

    out = pl.pallas_call(
        kernel,
        out_shape=out_shape,
        grid_spec=pltpu.PrefetchScalarGridSpec(
            num_scalar_prefetch=0,
            grid=(B // TB,),
            in_specs=in_specs,
            out_specs=out_spec,
        ),
        compiler_params=pltpu.CompilerParams(
            dimension_semantics=("parallel",),
            vmem_limit_bytes=cfg["vmem_limit"]),
    )(*args)

    if merge:
        out = out[:, :OUT]
    return out


if __name__ == "__main__":
    # Small shapes consistent with the module: hidden=32, ff=64, glimpses=2.
    B, S, H, FF, G = 4, 8, 32, 64, 2

    key = jax.random.PRNGKey(0)
    ks = jax.random.split(key, 7)
    x = jax.random.normal(ks[0], (B, S, H), dtype=jnp.float32)

    # PyTorch-style pad mask [B, 1, 1, S]; varying amounts of padding.
    lengths = jnp.array([S, S - 3, S, S - 6])
    x_mask = (jnp.arange(S)[None, :] >= lengths[:, None]).reshape(B, 1, 1, S)

    # Deterministic synthetic parameters (module __init__ shapes).
    w1 = jax.random.normal(ks[1], (H, FF), dtype=jnp.float32) * 0.1
    b1 = jax.random.normal(ks[2], (FF,), dtype=jnp.float32) * 0.1
    w2 = jax.random.normal(ks[3], (FF, G), dtype=jnp.float32) * 0.1
    b2 = jax.random.normal(ks[4], (G,), dtype=jnp.float32) * 0.1
    wm = jax.random.normal(ks[5], (G * H, 2 * H), dtype=jnp.float32) * 0.1
    bm = jax.random.normal(ks[6], (2 * H,), dtype=jnp.float32) * 0.1
    params = (w1, b1, w2, b2, wm, bm)

    # Pure-JAX reference of the PyTorch forward.
    def ref(xv, maskv):
        Bv, Sv, _ = xv.shape
        att = jnp.maximum(xv @ w1 + b1, 0.0) @ w2 + b2          # [B, S, G]
        m = maskv.reshape(Bv, Sv)[:, :, None]
        att = jnp.where(m, -1e9, att)
        att = jax.nn.softmax(att, axis=1)
        attd = jnp.einsum('bsg,bsh->bgh', att, xv)              # [B, G, H]
        merged = attd.reshape(Bv, G * H) @ wm + bm              # [B, 2H]
        return merged, attd

    ref_merge, ref_stack = ref(x, x_mask)

    # Precise path (all-f32 matmuls, exact divide): tight tolerance.
    out_merge_f32 = jax.block_until_ready(
        att_flat(x, x_mask, params, flat_glimpse=G, merge=True, fast=False))
    out_stack_f32 = jax.block_until_ready(
        att_flat(x, x_mask, params, flat_glimpse=G, merge=False, fast=False))
    np.testing.assert_allclose(np.asarray(out_merge_f32), np.asarray(ref_merge),
                               rtol=1e-4, atol=1e-4)
    np.testing.assert_allclose(np.asarray(out_stack_f32), np.asarray(ref_stack),
                               rtol=1e-4, atol=1e-4)

    # Fast path (bf16 MXU operands + approx reciprocal): looser tolerance.
    out_merge_bf = jax.block_until_ready(
        att_flat(x, x_mask, params, flat_glimpse=G, merge=True, fast=True))
    out_stack_bf = jax.block_until_ready(
        att_flat(x, x_mask, params, flat_glimpse=G, merge=False, fast=True))
    np.testing.assert_allclose(np.asarray(out_merge_bf), np.asarray(ref_merge),
                               rtol=3e-2, atol=3e-2)
    np.testing.assert_allclose(np.asarray(out_stack_bf), np.asarray(ref_stack),
                               rtol=3e-2, atol=3e-2)

    # Odd sequence length: exercises the in-wrapper S padding (S=7 -> 8).
    S2 = 7
    x2 = x[:, :S2, :]
    lengths2 = jnp.minimum(lengths, S2)
    x_mask2 = (jnp.arange(S2)[None, :] >= lengths2[:, None]).reshape(B, 1, 1, S2)
    ref2_merge, ref2_stack = ref(x2, x_mask2)
    out2_merge = jax.block_until_ready(
        att_flat(x2, x_mask2, params, flat_glimpse=G, merge=True, fast=False))
    out2_stack = jax.block_until_ready(
        att_flat(x2, x_mask2, params, flat_glimpse=G, merge=False, fast=False))
    np.testing.assert_allclose(np.asarray(out2_merge), np.asarray(ref2_merge),
                               rtol=1e-4, atol=1e-4)
    np.testing.assert_allclose(np.asarray(out2_stack), np.asarray(ref2_stack),
                               rtol=1e-4, atol=1e-4)

    print("KERNEL_OK")
</pallas_src>

<mosaic_0001>
module attributes {stable_mosaic.version = 11 : i64} {
  func.func @_attflat_kernel(%arg0: i32, %arg1: memref<4x8x32xf32, #tpu.memory_space<vmem>>, %arg2: memref<4x8xf32, #tpu.memory_space<vmem>>, %arg3: memref<32x64xf32, #tpu.memory_space<vmem>>, %arg4: memref<1x64xf32, #tpu.memory_space<vmem>>, %arg5: memref<64x2xf32, #tpu.memory_space<vmem>>, %arg6: memref<1x2xf32, #tpu.memory_space<vmem>>, %arg7: memref<64x128xf32, #tpu.memory_space<vmem>>, %arg8: memref<1x128xf32, #tpu.memory_space<vmem>>, %arg9: memref<4x128xf32, #tpu.memory_space<vmem>>) attributes {dimension_semantics = [#tpu.dimension_semantics<parallel>], iteration_bounds = array<i64: 1>, scalar_prefetch = 0 : i64, scratch_operands = 0 : i64, tpu.core_type = #tpu.core_type<tc>, window_params = [{transform_indices = @transform_0, window_bounds = array<i64: 4, 8, 32>}, {transform_indices = @transform_1, window_bounds = array<i64: 4, 8>}, {pipeline_mode = #tpu.pipeline_mode<synchronous>, transform_indices = @transform_2, window_bounds = array<i64: 32, 64>}, {pipeline_mode = #tpu.pipeline_mode<synchronous>, transform_indices = @transform_3, window_bounds = array<i64: 1, 64>}, {pipeline_mode = #tpu.pipeline_mode<synchronous>, transform_indices = @transform_4, window_bounds = array<i64: 64, 2>}, {pipeline_mode = #tpu.pipeline_mode<synchronous>, transform_indices = @transform_5, window_bounds = array<i64: 1, 2>}, {pipeline_mode = #tpu.pipeline_mode<synchronous>, transform_indices = @transform_6, window_bounds = array<i64: 64, 128>}, {pipeline_mode = #tpu.pipeline_mode<synchronous>, transform_indices = @transform_7, window_bounds = array<i64: 1, 128>}, {transform_indices = @transform_8, window_bounds = array<i64: 4, 128>}]} {
    %c0 = arith.constant 0 : index
    %c0_0 = arith.constant 0 : index
    %c0_1 = arith.constant 0 : index
    %0 = vector.load %arg1[%c0, %c0_0, %c0_1] : memref<4x8x32xf32, #tpu.memory_space<vmem>>, vector<4x8x32xf32>
    %1 = vector.shape_cast %0 : vector<4x8x32xf32> to vector<32x32xf32>
    %c0_2 = arith.constant 0 : index
    %c0_3 = arith.constant 0 : index
    %2 = vector.load %arg3[%c0_2, %c0_3] : memref<32x64xf32, #tpu.memory_space<vmem>>, vector<32x64xf32>
    %cst = arith.constant dense<0.000000e+00> : vector<32x64xf32>
    %3 = tpu.matmul %1, %2, %cst {dimension_numbers = #tpu.dot_dimension_numbers<[1], [0], [0], [1], [0, 0, 1, 1], [], []>} : vector<32x32xf32>, vector<32x64xf32>, vector<32x64xf32> -> vector<32x64xf32>
    %c0_4 = arith.constant 0 : index
    %c0_5 = arith.constant 0 : index
    %4 = vector.load %arg4[%c0_4, %c0_5] : memref<1x64xf32, #tpu.memory_space<vmem>>, vector<1x64xf32>
    %5 = vector.broadcast %4 : vector<1x64xf32> to vector<32x64xf32>
    %6 = arith.addf %3, %5 : vector<32x64xf32>
    %cst_6 = arith.constant 0.000000e+00 : f32
    %7 = vector.broadcast %cst_6 : f32 to vector<32x64xf32>
    %8 = arith.maximumf %6, %7 : vector<32x64xf32>
    %c0_7 = arith.constant 0 : index
    %c0_8 = arith.constant 0 : index
    %9 = vector.load %arg5[%c0_7, %c0_8] : memref<64x2xf32, #tpu.memory_space<vmem>>, vector<64x2xf32>
    %cst_9 = arith.constant dense<0.000000e+00> : vector<32x2xf32>
    %10 = tpu.matmul %8, %9, %cst_9 {dimension_numbers = #tpu.dot_dimension_numbers<[1], [0], [0], [1], [0, 0, 1, 1], [], []>} : vector<32x64xf32>, vector<64x2xf32>, vector<32x2xf32> -> vector<32x2xf32>
    %c0_10 = arith.constant 0 : index
    %c0_11 = arith.constant 0 : index
    %11 = vector.load %arg6[%c0_10, %c0_11] : memref<1x2xf32, #tpu.memory_space<vmem>>, vector<1x2xf32>
    %12 = vector.broadcast %11 : vector<1x2xf32> to vector<32x2xf32>
    %13 = arith.addf %10, %12 : vector<32x2xf32>
    %14 = vector.shape_cast %13 : vector<32x2xf32> to vector<4x8x2xf32>
    %c0_12 = arith.constant 0 : index
    %c0_13 = arith.constant 0 : index
    %15 = vector.load %arg2[%c0_12, %c0_13] : memref<4x8xf32, #tpu.memory_space<vmem>>, vector<4x8xf32>
    %16 = vector.shape_cast %15 : vector<4x8xf32> to vector<4x8x1xf32>
    %17 = vector.broadcast %16 : vector<4x8x1xf32> to vector<4x8x2xf32>
    %18 = arith.addf %14, %17 : vector<4x8x2xf32>
    %cst_14 = arith.constant dense<0xFF800000> : vector<4x2xf32>
    %19 = vector.multi_reduction <maximumf>, %18, %cst_14 [1] : vector<4x8x2xf32> to vector<4x2xf32>
    %20 = vector.shape_cast %19 : vector<4x2xf32> to vector<4x1x2xf32>
    %21 = vector.broadcast %20 : vector<4x1x2xf32> to vector<4x8x2xf32>
    %22 = arith.subf %18, %21 : vector<4x8x2xf32>
    %23 = math.exp %22 : vector<4x8x2xf32>
    %cst_15 = arith.constant dense<0.000000e+00> : vector<4x2xf32>
    %24 = vector.multi_reduction <add>, %23, %cst_15 [1] : vector<4x8x2xf32> to vector<4x2xf32>
    %25 = vector.shape_cast %24 : vector<4x2xf32> to vector<4x1x2xf32>
    %26 = vector.broadcast %25 : vector<4x1x2xf32> to vector<4x8x2xf32>
    %27 = arith.divf %23, %26 : vector<4x8x2xf32>
    %cst_16 = arith.constant 0.000000e+00 : f32
    %28 = vector.broadcast %cst_16 : f32 to vector<4x128xf32>
    %29 = vector.extract_strided_slice %27 {offsets = [0, 0, 0], sizes = [4, 8, 1], strides = [1, 1, 1]} : vector<4x8x2xf32> to vector<4x8x1xf32>
    %30 = vector.broadcast %29 : vector<4x8x1xf32> to vector<4x8x32xf32>
    %31 = arith.mulf %30, %0 : vector<4x8x32xf32>
    %cst_17 = arith.constant dense<0.000000e+00> : vector<4x32xf32>
    %32 = vector.multi_reduction <add>, %31, %cst_17 [1] : vector<4x8x32xf32> to vector<4x32xf32>
    %c0_18 = arith.constant 0 : index
    %c0_19 = arith.constant 0 : index
    %33 = vector.load %arg7[%c0_18, %c0_19] : memref<64x128xf32, #tpu.memory_space<vmem>>, vector<32x128xf32>
    %cst_20 = arith.constant dense<0.000000e+00> : vector<4x128xf32>
    %34 = tpu.matmul %32, %33, %cst_20 {dimension_numbers = #tpu.dot_dimension_numbers<[1], [0], [0], [1], [0, 0, 1, 1], [], []>} : vector<4x32xf32>, vector<32x128xf32>, vector<4x128xf32> -> vector<4x128xf32>
    %35 = arith.addf %28, %34 : vector<4x128xf32>
    %36 = vector.extract_strided_slice %27 {offsets = [0, 0, 1], sizes = [4, 8, 1], strides = [1, 1, 1]} : vector<4x8x2xf32> to vector<4x8x1xf32>
    %37 = vector.broadcast %36 : vector<4x8x1xf32> to vector<4x8x32xf32>
    %38 = arith.mulf %37, %0 : vector<4x8x32xf32>
    %cst_21 = arith.constant dense<0.000000e+00> : vector<4x32xf32>
    %39 = vector.multi_reduction <add>, %38, %cst_21 [1] : vector<4x8x32xf32> to vector<4x32xf32>
    %c32 = arith.constant 32 : index
    %c0_22 = arith.constant 0 : index
    %40 = vector.load %arg7[%c32, %c0_22] : memref<64x128xf32, #tpu.memory_space<vmem>>, vector<32x128xf32>
    %cst_23 = arith.constant dense<0.000000e+00> : vector<4x128xf32>
    %41 = tpu.matmul %39, %40, %cst_23 {dimension_numbers = #tpu.dot_dimension_numbers<[1], [0], [0], [1], [0, 0, 1, 1], [], []>} : vector<4x32xf32>, vector<32x128xf32>, vector<4x128xf32> -> vector<4x128xf32>
    %42 = arith.addf %35, %41 : vector<4x128xf32>
    %c0_24 = arith.constant 0 : index
    %c0_25 = arith.constant 0 : index
    %43 = vector.load %arg8[%c0_24, %c0_25] : memref<1x128xf32, #tpu.memory_space<vmem>>, vector<1x128xf32>
    %44 = vector.broadcast %43 : vector<1x128xf32> to vector<4x128xf32>
    %45 = arith.addf %42, %44 : vector<4x128xf32>
    %c0_26 = arith.constant 0 : index
    %c0_27 = arith.constant 0 : index
    %46 = vector.load %arg9[%c0_26, %c0_27] : memref<4x128xf32, #tpu.memory_space<vmem>>, vector<4x128xf32>
    tpu.vector_store %arg9[%c0_26, %c0_27], %45 {strides = array<i32>} : memref<4x128xf32, #tpu.memory_space<vmem>>, vector<4x128xf32>,
    return
  }
  func.func @transform_0(%arg0: i32) -> (i32, i32, i32) {
    %c0_i32 = arith.constant 0 : i32
    %c0_i32_0 = arith.constant 0 : i32
    %c0_i32_1 = arith.constant 0 : i32
    return %arg0, %c0_i32, %c0_i32_0 : i32, i32, i32
  }
  func.func @transform_1(%arg0: i32) -> (i32, i32) {
    %c0_i32 = arith.constant 0 : i32
    %c0_i32_0 = arith.constant 0 : i32
    return %arg0, %c0_i32 : i32, i32
  }
  func.func @transform_2(%arg0: i32) -> (i32, i32) {
    %c0_i32 = arith.constant 0 : i32
    %c0_i32_0 = arith.constant 0 : i32
    %c0_i32_1 = arith.constant 0 : i32
    return %c0_i32, %c0_i32_0 : i32, i32
  }
  func.func @transform_3(%arg0: i32) -> (i32, i32) {
    %c0_i32 = arith.constant 0 : i32
    %c0_i32_0 = arith.constant 0 : i32
    %c0_i32_1 = arith.constant 0 : i32
    return %c0_i32, %c0_i32_0 : i32, i32
  }
  func.func @transform_4(%arg0: i32) -> (i32, i32) {
    %c0_i32 = arith.constant 0 : i32
    %c0_i32_0 = arith.constant 0 : i32
    %c0_i32_1 = arith.constant 0 : i32
    return %c0_i32, %c0_i32_0 : i32, i32
  }
  func.func @transform_5(%arg0: i32) -> (i32, i32) {
    %c0_i32 = arith.constant 0 : i32
    %c0_i32_0 = arith.constant 0 : i32
    %c0_i32_1 = arith.constant 0 : i32
    return %c0_i32, %c0_i32_0 : i32, i32
  }
  func.func @transform_6(%arg0: i32) -> (i32, i32) {
    %c0_i32 = arith.constant 0 : i32
    %c0_i32_0 = arith.constant 0 : i32
    %c0_i32_1 = arith.constant 0 : i32
    return %c0_i32, %c0_i32_0 : i32, i32
  }
  func.func @transform_7(%arg0: i32) -> (i32, i32) {
    %c0_i32 = arith.constant 0 : i32
    %c0_i32_0 = arith.constant 0 : i32
    %c0_i32_1 = arith.constant 0 : i32
    return %c0_i32, %c0_i32_0 : i32, i32
  }
  func.func @transform_8(%arg0: i32) -> (i32, i32) {
    %c0_i32 = arith.constant 0 : i32
    %c0_i32_0 = arith.constant 0 : i32
    return %arg0, %c0_i32 : i32, i32
  }
}

</mosaic_0001>

<llo_original>
// kernel: tpu_custom_call.1
$region0: #{tpu_custom_call.1}
  #allocation0 [shape = 'u32[]', space=smem, size = 0x4, offset = 0x4, fixed_abs, tag = 'smem constant byte address 0x4 - core index']
  #allocation1 [shape = 'u32[144,128]{1,0:T(1,128)}', space=vmem, size = 0x12000, scoped, tag = 'internal scratch']
  %s0 = inlined_call_operand.hbm [shape: f32[4,8,32], index: 0, kind: input, shape index: {}]
  %s1 = inlined_call_operand.hbm [shape: f32[4,8], index: 1, kind: input, shape index: {}]
  %s2 = inlined_call_operand.hbm [shape: f32[32,64], index: 2, kind: input, shape index: {}]
  %s3 = inlined_call_operand.hbm [shape: f32[1,64], index: 3, kind: input, shape index: {}]
  %s4 = inlined_call_operand.hbm [shape: f32[64,2], index: 4, kind: input, shape index: {}]
  %s5 = inlined_call_operand.hbm [shape: f32[1,2], index: 5, kind: input, shape index: {}]
  %s6 = inlined_call_operand.hbm [shape: f32[64,128], index: 6, kind: input, shape index: {}]
  %s7 = inlined_call_operand.hbm [shape: f32[1,128], index: 7, kind: input, shape index: {}]
  %s8 = inlined_call_operand.hbm [shape: f32[4,128], index: 8, kind: output, shape index: {}]
  %s9 = sld [smem:[#allocation0]]
  $region74: #{tpu_custom_call.1} parent=0
    _
  %s11 = ssub.s32 1, %s9
  %s12 = scalar_select 0, %s11, %s9
  $region1: #{tpu_custom_call.1} parent=0
    #allocation2 [shape = 'u8[16384]{0}', space=vmem, size = 0x4000, scoped, tag = 'input window, operand 0, single buffered']
    #allocation3 [shape = 's32[1]{0}', space=sflag, size = 0x4, scoped, tag = 'scoped memory for tpu_custom_call.1']
    #allocation4 [shape = 's32[1]{0}', space=sflag, size = 0x4, scoped, tag = 'scoped memory for tpu_custom_call.1']
    #allocation5 [shape = 'u8[2048]{0}', space=vmem, size = 0x800, scoped, tag = 'input window, operand 1, single buffered']
    #allocation6 [shape = 's32[1]{0}', space=sflag, size = 0x4, scoped, tag = 'scoped memory for tpu_custom_call.1']
    #allocation7 [shape = 'u8[16384]{0}', space=vmem, size = 0x4000, scoped, tag = 'input window, operand 2, single buffered']
    #allocation8 [shape = 'u8[512]{0}', space=vmem, size = 0x400, scoped, tag = 'input window, operand 3, single buffered']
    #allocation9 [shape = 's32[1]{0}', space=sflag, size = 0x4, scoped, tag = 'scoped memory for tpu_custom_call.1']
    #allocation10 [shape = 'u8[32768]{0}', space=vmem, size = 0x8000, scoped, tag = 'input window, operand 4, single buffered']
    #allocation11 [shape = 'u8[512]{0}', space=vmem, size = 0x400, scoped, tag = 'input window, operand 5, single buffered']
    #allocation12 [shape = 's32[1]{0}', space=sflag, size = 0x4, scoped, tag = 'scoped memory for tpu_custom_call.1']
    #allocation13 [shape = 'u8[32768]{0}', space=vmem, size = 0x8000, scoped, tag = 'input window, operand 6, single buffered']
    #allocation14 [shape = 'u8[512]{0}', space=vmem, size = 0x400, scoped, tag = 'input window, operand 7, single buffered']
    #allocation15 [shape = 's32[1]{0}', space=sflag, size = 0x4, scoped, tag = 'scoped memory for tpu_custom_call.1']
    #allocation16 [shape = 'u8[2048]{0}', space=vmem, size = 0x800, scoped, tag = 'output window, operand 0, single buffered']
    %13 = vsyncpa [#allocation3], 0
    %14 = vsyncpa [#allocation6], 0
    %15 = vsyncpa [#allocation9], 0
    %16 = vsyncpa [#allocation12], 0
    %17 = vsyncpa [#allocation15], 0
    %18 = vsyncpa [#allocation4], 0
    // Predicated region
    $region2: #{tpu_custom_call.1} parent=1 // pred_check
      _
    $region3: #{tpu_custom_call.1} parent=1 // pred_check_branch
      %20 = sbr.rel (0) target = $region5
    $region4: #{tpu_custom_call.1} parent=1 // pred_region
      %s22 = ssub.s32 512, 512
      %23 = vsyncadd [#allocation3], %s22
      %s24 = sshll.u32 [#allocation2], 4
      %s25 = int_to_ptr.vmem [resolvable:$true] %s24
      %30 = dma.hbm_to_vmem [thread:$0]  %s0, 512, %s25, [#allocation3], 128, 128, 8
    $region5: #{tpu_custom_call.1} parent=1 // pred_fallthru
      _
    // Predicated region
    $region6: #{tpu_custom_call.1} parent=1 // pred_check
      _
    $region7: #{tpu_custom_call.1} parent=1 // pred_check_branch
      %32 = sbr.rel (0) target = $region9
    $region8: #{tpu_custom_call.1} parent=1 // pred_region
      %s34 = ssub.s32 64, 64
      %35 = vsyncadd [#allocation6], %s34
      %s37 = sshll.u32 [#allocation5], 4
      %s38 = int_to_ptr.vmem [resolvable:$true] %s37
      %40 = dma.hbm_to_vmem [thread:$0]  %s1, 64, %s38, [#allocation6]
    $region9: #{tpu_custom_call.1} parent=1 // pred_fallthru
      _
    // Predicated region
    $region10: #{tpu_custom_call.1} parent=1 // pred_check
      _
    $region11: #{tpu_custom_call.1} parent=1 // pred_check_branch
      %42 = sbr.rel (0) target = $region13
    $region12: #{tpu_custom_call.1} parent=1 // pred_region
      %s44 = ssub.s32 512, 512
      %45 = vsyncadd [#allocation6], %s44
      %s46 = sshll.u32 [#allocation7], 4
      %s47 = int_to_ptr.vmem [resolvable:$true] %s46
      %52 = dma.hbm_to_vmem [thread:$0]  %s2, 512, %s47, [#allocation6], 128, 128, 8
    $region13: #{tpu_custom_call.1} parent=1 // pred_fallthru
      _
    // Predicated region
    $region14: #{tpu_custom_call.1} parent=1 // pred_check
      _
    $region15: #{tpu_custom_call.1} parent=1 // pred_check_branch
      %54 = sbr.rel (0) target = $region17
    $region16: #{tpu_custom_call.1} parent=1 // pred_region
      %s56 = ssub.s32 16, 16
      %57 = vsyncadd [#allocation9], %s56
      %s59 = sshll.u32 [#allocation8], 4
      %s60 = int_to_ptr.vmem [resolvable:$true] %s59
      %62 = dma.hbm_to_vmem [thread:$0]  %s3, 16, %s60, [#allocation9]
    $region17: #{tpu_custom_call.1} parent=1 // pred_fallthru
      _
    // Predicated region
    $region18: #{tpu_custom_call.1} parent=1 // pred_check
      _
    $region19: #{tpu_custom_call.1} parent=1 // pred_check_branch
      %64 = sbr.rel (0) target = $region21
    $region20: #{tpu_custom_call.1} parent=1 // pred_region
      %s66 = ssub.s32 1024, 1024
      %67 = vsyncadd [#allocation9], %s66
      %s68 = sshll.u32 [#allocation10], 4
      %s69 = int_to_ptr.vmem [resolvable:$true] %s68
      %74 = dma.hbm_to_vmem [thread:$0]  %s4, 1024, %s69, [#allocation9], 128, 128, 8
    $region21: #{tpu_custom_call.1} parent=1 // pred_fallthru
      _
    // Predicated region
    $region22: #{tpu_custom_call.1} parent=1 // pred_check
      _
    $region23: #{tpu_custom_call.1} parent=1 // pred_check_branch
      %76 = sbr.rel (0) target = $region25
    $region24: #{tpu_custom_call.1} parent=1 // pred_region
      %s78 = ssub.s32 16, 16
      %79 = vsyncadd [#allocation12], %s78
      %s81 = sshll.u32 [#allocation11], 4
      %s82 = int_to_ptr.vmem [resolvable:$true] %s81
      %84 = dma.hbm_to_vmem [thread:$0]  %s5, 16, %s82, [#allocation12]
    $region25: #{tpu_custom_call.1} parent=1 // pred_fallthru
      _
    // Predicated region
    $region26: #{tpu_custom_call.1} parent=1 // pred_check
      _
    $region27: #{tpu_custom_call.1} parent=1 // pred_check_branch
      %86 = sbr.rel (0) target = $region29
    $region28: #{tpu_custom_call.1} parent=1 // pred_region
      %s88 = ssub.s32 1024, 1024
      %89 = vsyncadd [#allocation12], %s88
      %s90 = sshll.u32 [#allocation13], 4
      %s91 = int_to_ptr.vmem [resolvable:$true] %s90
      %96 = dma.hbm_to_vmem [thread:$0]  %s6, 1024, %s91, [#allocation12], 128, 128, 8
    $region29: #{tpu_custom_call.1} parent=1 // pred_fallthru
      _
    // Predicated region
    $region30: #{tpu_custom_call.1} parent=1 // pred_check
      _
    $region31: #{tpu_custom_call.1} parent=1 // pred_check_branch
      %98 = sbr.rel (0) target = $region33
    $region32: #{tpu_custom_call.1} parent=1 // pred_region
      %s100 = ssub.s32 16, 16
      %101 = vsyncadd [#allocation15], %s100
      %s103 = sshll.u32 [#allocation14], 4
      %s104 = int_to_ptr.vmem [resolvable:$true] %s103
      %106 = dma.hbm_to_vmem [thread:$0]  %s7, 16, %s104, [#allocation15]
    $region33: #{tpu_custom_call.1} parent=1 // pred_fallthru
      _
    // Predicated region
    $region34: #{tpu_custom_call.1} parent=1 // pred_check
      _
    $region35: #{tpu_custom_call.1} parent=1 // pred_check_branch
      %108 = sbr.rel (0) target = $region37
    $region36: #{tpu_custom_call.1} parent=1 // pred_region
      %109 = dma.done [#allocation3], 512
    $region37: #{tpu_custom_call.1} parent=1 // pred_fallthru
      _
    // Predicated region
    $region38: #{tpu_custom_call.1} parent=1 // pred_check
      _
    $region39: #{tpu_custom_call.1} parent=1 // pred_check_branch
      %111 = sbr.rel (0) target = $region41
    $region40: #{tpu_custom_call.1} parent=1 // pred_region
      %112 = dma.done [#allocation6], 64
    $region41: #{tpu_custom_call.1} parent=1 // pred_fallthru
      _
    // Predicated region
    $region42: #{tpu_custom_call.1} parent=1 // pred_check
      _
    $region43: #{tpu_custom_call.1} parent=1 // pred_check_branch
      %114 = sbr.rel (0) target = $region45
    $region44: #{tpu_custom_call.1} parent=1 // pred_region
      %115 = dma.done [#allocation6], 512
    $region45: #{tpu_custom_call.1} parent=1 // pred_fallthru
      _
    // Predicated region
    $region46: #{tpu_custom_call.1} parent=1 // pred_check
      _
    $region47: #{tpu_custom_call.1} parent=1 // pred_check_branch
      %117 = sbr.rel (0) target = $region49
    $region48: #{tpu_custom_call.1} parent=1 // pred_region
      %118 = dma.done [#allocation9], 16
    $region49: #{tpu_custom_call.1} parent=1 // pred_fallthru
      _
    // Predicated region
    $region50: #{tpu_custom_call.1} parent=1 // pred_check
      _
    $region51: #{tpu_custom_call.1} parent=1 // pred_check_branch
      %120 = sbr.rel (0) target = $region53
    $region52: #{tpu_custom_call.1} parent=1 // pred_region
      %121 = dma.done [#allocation9], 1024
    $region53: #{tpu_custom_call.1} parent=1 // pred_fallthru
      _
    // Predicated region
    $region54: #{tpu_custom_call.1} parent=1 // pred_check
      _
    $region55: #{tpu_custom_call.1} parent=1 // pred_check_branch
      %123 = sbr.rel (0) target = $region57
    $region56: #{tpu_custom_call.1} parent=1 // pred_region
      %124 = dma.done [#allocation12], 16
    $region57: #{tpu_custom_call.1} parent=1 // pred_fallthru
      _
    // Predicated region
    $region58: #{tpu_custom_call.1} parent=1 // pred_check
      _
    $region59: #{tpu_custom_call.1} parent=1 // pred_check_branch
      %126 = sbr.rel (0) target = $region61
    $region60: #{tpu_custom_call.1} parent=1 // pred_region
      %127 = dma.done [#allocation12], 1024
    $region61: #{tpu_custom_call.1} parent=1 // pred_fallthru
      _
    // Predicated region
    $region62: #{tpu_custom_call.1} parent=1 // pred_check
      _
    $region63: #{tpu_custom_call.1} parent=1 // pred_check_branch
      %129 = sbr.rel (0) target = $region65
    $region64: #{tpu_custom_call.1} parent=1 // pred_region
      %130 = dma.done [#allocation15], 16
    $region65: #{tpu_custom_call.1} parent=1 // pred_fallthru
      _
    %v131 = vld [vmem:[#allocation2] sm:$0xff]
    %v132 = vld [vmem:[#allocation2 + $0x8] sm:$0xff]
    %v133 = vld [vmem:[#allocation2 + $0x10] sm:$0xff]
    %v134 = vld [vmem:[#allocation2 + $0x18] sm:$0xff]
    %v135 = vld [vmem:[#allocation7] sm:$0xff]
    %v136 = vld [vmem:[#allocation7 + $0x8] sm:$0xff]
    %v137 = vld [vmem:[#allocation7 + $0x10] sm:$0xff]
    %v138 = vld [vmem:[#allocation7 + $0x18] sm:$0xff]
    %v139 = vld [vmem:[#allocation8] sm:$0x1]
    %v141 = vlaneseq
    %v142 = vshrl.u32 %v141, 7
    %v143 = vsub.s32 0, %v142
    %v144 = vrot.slane %v139, %v143
    %vm146 = vcmask 261120
    %v148 = vsel %vm146, %v131, 0
    %v151 = vsel %vm146, %v132, 0
    %v154 = vsel %vm146, %v133, 0
    %v157 = vsel %vm146, %v134, 0
    %159 = vmatprep.subr.mxu0 0.0
    %160 = vmatpush1.msra.mxu0 %v135
    %161 = vmatprep.subr.mxu0 0.0
    %162 = vmatpush1.msra.mxu0 %v136
    %163 = vmatprep.subr.mxu0 0.0
    %164 = vmatpush1.msra.mxu0 %v137
    %165 = vmatprep.subr.mxu0 0.0
    %166 = vmatpush1.msra.mxu0 %v138
    %167 = vmatprep.subr.mxu0 0.0
    %168 = vmatpush1.msra.mxu0 0.0
    %169 = vmatprep.subr.mxu0 0.0
    %170 = vmatpush1.msra.mxu0 0.0
    %171 = vmatprep.subr.mxu0 0.0
    %172 = vmatpush1.msra.mxu0 0.0
    %173 = vmatprep.subr.mxu0 0.0
    %174 = vmatpush1.msra.mxu0 0.0
    %175 = vmatprep.subr.mxu0 0.0
    %176 = vmatpush1.msra.mxu0 0.0
    %177 = vmatprep.subr.mxu0 0.0
    %178 = vmatpush1.msra.mxu0 0.0
    %179 = vmatprep.subr.mxu0 0.0
    %180 = vmatpush1.msra.mxu0 0.0
    %181 = vmatprep.subr.mxu0 0.0
    %182 = vmatpush1.msra.mxu0 0.0
    %183 = vmatprep.subr.mxu0 0.0
    %184 = vmatpush1.msra.mxu0 0.0
    %185 = vmatprep.subr.mxu0 0.0
    %186 = vmatpush1.msra.mxu0 0.0
    %187 = vmatprep.subr.mxu0 0.0
    %188 = vmatpush1.msra.mxu0 0.0
    %189 = vmatprep.subr.mxu0 0.0
    %190 = vmatpush1.msra.mxu0 0.0
    %191 = vmatprep.subr.mxu0 0.0
    %192 = vmatpush1.msra.mxu0 0.0
    %193 = vmatprep.subr.mxu0 0.0
    %194 = vmatpush1.msra.mxu0 0.0
    %195 = vmatprep.subr.mxu0 0.0
    %196 = vmatpush1.msra.mxu0 0.0
    %197 = vmatprep.subr.mxu0 0.0
    %198 = vmatpush1.msra.mxu0 0.0
    %199 = vmatprep.subr.mxu0 0.0
    %200 = vmatpush1.msra.mxu0 0.0
    %201 = vmatprep.subr.mxu0 0.0
    %202 = vmatpush1.msra.mxu0 0.0
    %203 = vmatprep.subr.mxu0 0.0
    %204 = vmatpush1.msra.mxu0 0.0
    %205 = vmatprep.subr.mxu0 0.0
    %206 = vmatpush1.msra.mxu0 0.0
    %207 = vmatprep.subr.mxu0 0.0
    %208 = vmatpush1.msra.mxu0 0.0
    %209 = vmatprep.subr.mxu0 0.0
    %210 = vmatpush1.msra.mxu0 0.0
    %211 = vmatprep.subr.mxu0 0.0
    %212 = vmatpush1.msra.mxu0 0.0
    %213 = vmatprep.subr.mxu0 0.0
    %214 = vmatpush1.msra.mxu0 0.0
    %215 = vmatprep.subr.mxu0 0.0
    %216 = vmatpush1.msra.mxu0 0.0
    %217 = vmatprep.subr.mxu0 0.0
    %218 = vmatpush1.msra.mxu0 0.0
    %219 = vmatprep.subr.mxu0 0.0
    %220 = vmatpush1.msra.mxu0 0.0
    %221 = vmatprep.subr.mxu0 0.0
    %222 = vmatpush1.msra.mxu0 0.0
    %223 = vmatprep.mubr.f32.mxu0 0.0
    %224 = vmatmul.mubr.f32.gmra.mrb[0].mxu0 %v148
    %v225 = vpop.f32.mrb[0].mxu0
    %v226 = vadd.f32 %v144, %v225
    %v227 = vpop.f32.mrb[0].mxu0
    %228 = vmatprep.mubr.f32.mxu0 0.0
    %229 = vmatmul.mubr.f32.gmra.mrb[0].mxu0 %v151
    %v230 = vpop.f32.mrb[0].mxu0
    %v231 = vadd.f32 %v144, %v230
    %v232 = vpop.f32.mrb[0].mxu0
    %233 = vmatprep.mubr.f32.mxu0 0.0
    %234 = vmatmul.mubr.f32.gmra.mrb[0].mxu0 %v154
    %v235 = vpop.f32.mrb[0].mxu0
    %v236 = vadd.f32 %v144, %v235
    %v237 = vpop.f32.mrb[0].mxu0
    %238 = vmatprep.mubr.f32.mxu0 0.0
    %239 = vmatmul.mubr.f32.gmra.mrb[0].mxu0 %v157
    %v240 = vpop.f32.mrb[0].mxu0
    %v241 = vadd.f32 %v144, %v240
    %v242 = vpop.f32.mrb[0].mxu0
    %243 = vdwg.mxu0
    %v244 = vmax.f32 %v226, 0.0
    %v245 = vmax.f32 %v231, 0.0
    %v246 = vmax.f32 %v236, 0.0
    %v247 = vmax.f32 %v241, 0.0
    %v248 = vld [vmem:[#allocation10] sm:$0xff]
    %v249 = vld [vmem:[#allocation10 + $0x8] sm:$0xff]
    %v250 = vld [vmem:[#allocation10 + $0x10] sm:$0xff]
    %v251 = vld [vmem:[#allocation10 + $0x18] sm:$0xff]
    %v252 = vld [vmem:[#allocation10 + $0x20] sm:$0xff]
    %v253 = vld [vmem:[#allocation10 + $0x28] sm:$0xff]
    %v254 = vld [vmem:[#allocation10 + $0x30] sm:$0xff]
    %v255 = vld [vmem:[#allocation10 + $0x38] sm:$0xff]
    %v256 = vld [vmem:[#allocation11] sm:$0x1]
    %v258 = vlaneseq
    %v259 = vshrl.u32 %v258, 7
    %v260 = vsub.s32 0, %v259
    %v261 = vrot.slane %v256, %v260
    %vm263 = vcmask 523264
    %v265 = vsel %vm263, %v244, 0
    %v268 = vsel %vm263, %v245, 0
    %v271 = vsel %vm263, %v246, 0
    %v274 = vsel %vm263, %v247, 0
    %276 = vmatprep.subr.mxu0 0.0
    %277 = vmatpush1.msra.mxu0 %v248
    %278 = vmatprep.subr.mxu0 0.0
    %279 = vmatpush1.msra.mxu0 %v249
    %280 = vmatprep.subr.mxu0 0.0
    %281 = vmatpush1.msra.mxu0 %v250
    %282 = vmatprep.subr.mxu0 0.0
    %283 = vmatpush1.msra.mxu0 %v251
    %284 = vmatprep.subr.mxu0 0.0
    %285 = vmatpush1.msra.mxu0 %v252
    %286 = vmatprep.subr.mxu0 0.0
    %287 = vmatpush1.msra.mxu0 %v253
    %288 = vmatprep.subr.mxu0 0.0
    %289 = vmatpush1.msra.mxu0 %v254
    %290 = vmatprep.subr.mxu0 0.0
    %291 = vmatpush1.msra.mxu0 %v255
    %292 = vmatprep.subr.mxu0 0.0
    %293 = vmatpush1.msra.mxu0 0.0
    %294 = vmatprep.subr.mxu0 0.0
    %295 = vmatpush1.msra.mxu0 0.0
    %296 = vmatprep.subr.mxu0 0.0
    %297 = vmatpush1.msra.mxu0 0.0
    %298 = vmatprep.subr.mxu0 0.0
    %299 = vmatpush1.msra.mxu0 0.0
    %300 = vmatprep.subr.mxu0 0.0
    %301 = vmatpush1.msra.mxu0 0.0
    %302 = vmatprep.subr.mxu0 0.0
    %303 = vmatpush1.msra.mxu0 0.0
    %304 = vmatprep.subr.mxu0 0.0
    %305 = vmatpush1.msra.mxu0 0.0
    %306 = vmatprep.subr.mxu0 0.0
    %307 = vmatpush1.msra.mxu0 0.0
    %308 = vmatprep.subr.mxu0 0.0
    %309 = vmatpush1.msra.mxu0 0.0
    %310 = vmatprep.subr.mxu0 0.0
    %311 = vmatpush1.msra.mxu0 0.0
    %312 = vmatprep.subr.mxu0 0.0
    %313 = vmatpush1.msra.mxu0 0.0
    %314 = vmatprep.subr.mxu0 0.0
    %315 = vmatpush1.msra.mxu0 0.0
    %316 = vmatprep.subr.mxu0 0.0
    %317 = vmatpush1.msra.mxu0 0.0
    %318 = vmatprep.subr.mxu0 0.0
    %319 = vmatpush1.msra.mxu0 0.0
    %320 = vmatprep.subr.mxu0 0.0
    %321 = vmatpush1.msra.mxu0 0.0
    %322 = vmatprep.subr.mxu0 0.0
    %323 = vmatpush1.msra.mxu0 0.0
    %324 = vmatprep.subr.mxu0 0.0
    %325 = vmatpush1.msra.mxu0 0.0
    %326 = vmatprep.subr.mxu0 0.0
    %327 = vmatpush1.msra.mxu0 0.0
    %328 = vmatprep.subr.mxu0 0.0
    %329 = vmatpush1.msra.mxu0 0.0
    %330 = vmatprep.subr.mxu0 0.0
    %331 = vmatpush1.msra.mxu0 0.0
    %332 = vmatprep.subr.mxu0 0.0
    %333 = vmatpush1.msra.mxu0 0.0
    %334 = vmatprep.subr.mxu0 0.0
    %335 = vmatpush1.msra.mxu0 0.0
    %336 = vmatprep.subr.mxu0 0.0
    %337 = vmatpush1.msra.mxu0 0.0
    %338 = vmatprep.subr.mxu0 0.0
    %339 = vmatpush1.msra.mxu0 0.0
    %340 = vmatprep.mubr.f32.mxu0 0.0
    %341 = vmatmul.mubr.f32.gmra.mrb[0].mxu0 %v265
    %v342 = vpop.f32.mrb[0].mxu0
    %v343 = vadd.f32 %v261, %v342
    %v344 = vpop.f32.mrb[0].mxu0
    %345 = vmatprep.mubr.f32.mxu0 0.0
    %346 = vmatmul.mubr.f32.gmra.mrb[0].mxu0 %v268
    %v347 = vpop.f32.mrb[0].mxu0
    %v348 = vadd.f32 %v261, %v347
    %v349 = vpop.f32.mrb[0].mxu0
    %350 = vmatprep.mubr.f32.mxu0 0.0
    %351 = vmatmul.mubr.f32.gmra.mrb[0].mxu0 %v271
    %v352 = vpop.f32.mrb[0].mxu0
    %v353 = vadd.f32 %v261, %v352
    %v354 = vpop.f32.mrb[0].mxu0
    %355 = vmatprep.mubr.f32.mxu0 0.0
    %356 = vmatmul.mubr.f32.gmra.mrb[0].mxu0 %v274
    %v357 = vpop.f32.mrb[0].mxu0
    %v358 = vadd.f32 %v261, %v357
    %v359 = vpop.f32.mrb[0].mxu0
    %360 = vdwg.mxu0
    %v361 = vld [vmem:[#allocation5] sm:$0xf]
    %v362 = vlaneseq
    %v363 = vshrl.u32 %v362, 7
    %v364 = vsub.s32 0, %v363
    %v365 = vrot.slane %v361, %v364
    %367 = vbcast.lane.b32.xlu0 %v365, 256
    %v368 = vpop.permute.xlu0 %367
    %v369 = vlaneseq
    %v370 = vshrl.u32 %v369, 7
    %v371 = vsub.s32 1, %v370
    %v372 = vrot.slane %v361, %v371
    %374 = vbcast.lane.b32.xlu0 %v372, 256
    %v375 = vpop.permute.xlu0 %374
    %v376 = vlaneseq
    %v377 = vshrl.u32 %v376, 7
    %v378 = vsub.s32 2, %v377
    %v379 = vrot.slane %v361, %v378
    %381 = vbcast.lane.b32.xlu0 %v379, 256
    %v382 = vpop.permute.xlu0 %381
    %v383 = vlaneseq
    %v384 = vshrl.u32 %v383, 7
    %v385 = vsub.s32 3, %v384
    %v386 = vrot.slane %v361, %v385
    %388 = vbcast.lane.b32.xlu0 %v386, 256
    %v389 = vpop.permute.xlu0 %388
    %v390 = vadd.f32 %v343, %v368
    %v391 = vadd.f32 %v348, %v375
    %v392 = vadd.f32 %v353, %v382
    %v393 = vadd.f32 %v358, %v389
    %vm394 = vcmask 15360
    %v395 = vsel %vm394, %v390, -inf
    %v396 = vrot.slane %v395, 4
    %v397 = vmax.f32 %v395, %v396
    %v398 = vrot.slane %v397, 2
    %v399 = vmax.f32 %v397, %v398
    %v400 = vrot.slane %v399, 1
    %v401 = vmax.f32 %v399, %v400
    %v402 = vsel %vm394, %v391, -inf
    %v403 = vrot.slane %v402, 4
    %v404 = vmax.f32 %v402, %v403
    %v405 = vrot.slane %v404, 2
    %v406 = vmax.f32 %v404, %v405
    %v407 = vrot.slane %v406, 1
    %v408 = vmax.f32 %v406, %v407
    %v409 = vsel %vm394, %v392, -inf
    %v410 = vrot.slane %v409, 4
    %v411 = vmax.f32 %v409, %v410
    %v412 = vrot.slane %v411, 2
    %v413 = vmax.f32 %v411, %v412
    %v414 = vrot.slane %v413, 1
    %v415 = vmax.f32 %v413, %v414
    %v416 = vsel %vm394, %v393, -inf
    %v417 = vrot.slane %v416, 4
    %v418 = vmax.f32 %v416, %v417
    %v419 = vrot.slane %v418, 2
    %v420 = vmax.f32 %v418, %v419
    %v421 = vrot.slane %v420, 1
    %v422 = vmax.f32 %v420, %v421
    %v423 = vsub.f32 %v390, %v401
    %v424 = vsub.f32 %v391, %v408
    %v425 = vsub.f32 %v392, %v415
    %v426 = vsub.f32 %v393, %v422
    %v427 = vmul.f32 %v423, 1.442695
    %v428 = vpow.pop %v427
    %v429 = vmul.f32 %v424, 1.442695
    %v430 = vpow.pop %v429
    %v431 = vmul.f32 %v425, 1.442695
    %v432 = vpow.pop %v431
    %v433 = vmul.f32 %v426, 1.442695
    %v434 = vpow.pop %v433
    %v435 = vsel %vm394, %v428, 0.0
    %v436 = vrot.slane %v435, 4
    %v437 = vadd.f32 %v435, %v436
    %v438 = vrot.slane %v437, 2
    %v439 = vadd.f32 %v437, %v438
    %v440 = vrot.slane %v439, 1
    %v441 = vadd.f32 %v439, %v440
    %v442 = vsel %vm394, %v430, 0.0
    %v443 = vrot.slane %v442, 4
    %v444 = vadd.f32 %v442, %v443
    %v445 = vrot.slane %v444, 2
    %v446 = vadd.f32 %v444, %v445
    %v447 = vrot.slane %v446, 1
    %v448 = vadd.f32 %v446, %v447
    %v449 = vsel %vm394, %v432, 0.0
    %v450 = vrot.slane %v449, 4
    %v451 = vadd.f32 %v449, %v450
    %v452 = vrot.slane %v451, 2
    %v453 = vadd.f32 %v451, %v452
    %v454 = vrot.slane %v453, 1
    %v455 = vadd.f32 %v453, %v454
    %v456 = vsel %vm394, %v434, 0.0
    %v457 = vrot.slane %v456, 4
    %v458 = vadd.f32 %v456, %v457
    %v459 = vrot.slane %v458, 2
    %v460 = vadd.f32 %v458, %v459
    %v461 = vrot.slane %v460, 1
    %v462 = vadd.f32 %v460, %v461
    %v463 = vrcp.pop %v441
    %v464 = vmul.f32 %v428, %v463
    %v465 = vrcp.pop %v448
    %v466 = vmul.f32 %v430, %v465
    %v467 = vrcp.pop %v455
    %v468 = vmul.f32 %v432, %v467
    %v469 = vrcp.pop %v462
    %v470 = vmul.f32 %v434, %v469
    %472 = vset.pattern.permute.xlu0 0
    %473 = vperm.xlu0 %472, %v464
    %v474 = vpop.permute.xlu0 %473
    %477 = vset.pattern.permute.xlu0 0
    %478 = vperm.xlu0 %477, %v466
    %v479 = vpop.permute.xlu0 %478
    %482 = vset.pattern.permute.xlu0 0
    %483 = vperm.xlu0 %482, %v468
    %v484 = vpop.permute.xlu0 %483
    %487 = vset.pattern.permute.xlu0 0
    %488 = vperm.xlu0 %487, %v470
    %v489 = vpop.permute.xlu0 %488
    %v491 = vmul.f32 %v474, %v131
    %v492 = vmul.f32 %v479, %v132
    %v493 = vmul.f32 %v484, %v133
    %v494 = vmul.f32 %v489, %v134
    %v495 = vsel %vm146, %v491, 0.0
    %v496 = vrot.slane %v495, 4
    %v497 = vadd.f32 %v495, %v496
    %v498 = vrot.slane %v497, 2
    %v499 = vadd.f32 %v497, %v498
    %v500 = vrot.slane %v499, 1
    %v501 = vadd.f32 %v499, %v500
    %v502 = vsel %vm146, %v492, 0.0
    %v503 = vrot.slane %v502, 4
    %v504 = vadd.f32 %v502, %v503
    %v505 = vrot.slane %v504, 2
    %v506 = vadd.f32 %v504, %v505
    %v507 = vrot.slane %v506, 1
    %v508 = vadd.f32 %v506, %v507
    %v509 = vsel %vm146, %v493, 0.0
    %v510 = vrot.slane %v509, 4
    %v511 = vadd.f32 %v509, %v510
    %v512 = vrot.slane %v511, 2
    %v513 = vadd.f32 %v511, %v512
    %v514 = vrot.slane %v513, 1
    %v515 = vadd.f32 %v513, %v514
    %v516 = vsel %vm146, %v494, 0.0
    %v517 = vrot.slane %v516, 4
    %v518 = vadd.f32 %v516, %v517
    %v519 = vrot.slane %v518, 2
    %v520 = vadd.f32 %v518, %v519
    %v521 = vrot.slane %v520, 1
    %v522 = vadd.f32 %v520, %v521
    %v523 = vld [vmem:[#allocation13] sm:$0xff]
    %v524 = vld [vmem:[#allocation13 + $0x8] sm:$0xff]
    %v525 = vld [vmem:[#allocation13 + $0x10] sm:$0xff]
    %v526 = vld [vmem:[#allocation13 + $0x18] sm:$0xff]
    %527 = vset.pattern.permute.xlu0 1
    %528 = vperm.xlu0 %527, %v464
    %v529 = vpop.permute.xlu0 %528
    %531 = vset.pattern.permute.xlu0 1
    %532 = vperm.xlu0 %531, %v466
    %v533 = vpop.permute.xlu0 %532
    %535 = vset.pattern.permute.xlu0 1
    %536 = vperm.xlu0 %535, %v468
    %v537 = vpop.permute.xlu0 %536
    %539 = vset.pattern.permute.xlu0 1
    %540 = vperm.xlu0 %539, %v470
    %v541 = vpop.permute.xlu0 %540
    %v543 = vmul.f32 %v529, %v131
    %v544 = vmul.f32 %v533, %v132
    %v545 = vmul.f32 %v537, %v133
    %v546 = vmul.f32 %v541, %v134
    %v547 = vsel %vm146, %v543, 0.0
    %v548 = vrot.slane %v547, 4
    %v549 = vadd.f32 %v547, %v548
    %v550 = vrot.slane %v549, 2
    %v551 = vadd.f32 %v549, %v550
    %v552 = vrot.slane %v551, 1
    %v553 = vadd.f32 %v551, %v552
    %v554 = vsel %vm146, %v544, 0.0
    %v555 = vrot.slane %v554, 4
    %v556 = vadd.f32 %v554, %v555
    %v557 = vrot.slane %v556, 2
    %v558 = vadd.f32 %v556, %v557
    %v559 = vrot.slane %v558, 1
    %v560 = vadd.f32 %v558, %v559
    %v561 = vsel %vm146, %v545, 0.0
    %v562 = vrot.slane %v561, 4
    %v563 = vadd.f32 %v561, %v562
    %v564 = vrot.slane %v563, 2
    %v565 = vadd.f32 %v563, %v564
    %v566 = vrot.slane %v565, 1
    %v567 = vadd.f32 %v565, %v566
    %v568 = vsel %vm146, %v546, 0.0
    %v569 = vrot.slane %v568, 4
    %v570 = vadd.f32 %v568, %v569
    %v571 = vrot.slane %v570, 2
    %v572 = vadd.f32 %v570, %v571
    %v573 = vrot.slane %v572, 1
    %v574 = vadd.f32 %v572, %v573
    %v575 = vld [vmem:[#allocation13 + $0x20] sm:$0xff]
    %v576 = vld [vmem:[#allocation13 + $0x28] sm:$0xff]
    %v577 = vld [vmem:[#allocation13 + $0x30] sm:$0xff]
    %v578 = vld [vmem:[#allocation13 + $0x38] sm:$0xff]
    %vm583 = vcmask 1041409
    %v584 = vsel %vm583, %v560, %v553
    %vm585 = vcmask 1042434
    %v586 = vsel %vm585, %v567, %v584
    %vm587 = vcmask 1043459
    %v588 = vsel %vm587, %v574, %v586
    %v589 = vsel %vm146, %v588, 0
    %591 = vmatprep.subr.mxu0 0.0
    %592 = vmatpush1.msra.mxu0 %v575
    %593 = vmatprep.subr.mxu0 0.0
    %594 = vmatpush1.msra.mxu0 %v576
    %595 = vmatprep.subr.mxu0 0.0
    %596 = vmatpush1.msra.mxu0 %v577
    %597 = vmatprep.subr.mxu0 0.0
    %598 = vmatpush1.msra.mxu0 %v578
    %599 = vmatprep.subr.mxu0 0.0
    %600 = vmatpush1.msra.mxu0 0.0
    %601 = vmatprep.subr.mxu0 0.0
    %602 = vmatpush1.msra.mxu0 0.0
    %603 = vmatprep.subr.mxu0 0.0
    %604 = vmatpush1.msra.mxu0 0.0
    %605 = vmatprep.subr.mxu0 0.0
    %606 = vmatpush1.msra.mxu0 0.0
    %607 = vmatprep.subr.mxu0 0.0
    %608 = vmatpush1.msra.mxu0 0.0
    %609 = vmatprep.subr.mxu0 0.0
    %610 = vmatpush1.msra.mxu0 0.0
    %611 = vmatprep.subr.mxu0 0.0
    %612 = vmatpush1.msra.mxu0 0.0
    %613 = vmatprep.subr.mxu0 0.0
    %614 = vmatpush1.msra.mxu0 0.0
    %615 = vmatprep.subr.mxu0 0.0
    %616 = vmatpush1.msra.mxu0 0.0
    %617 = vmatprep.subr.mxu0 0.0
    %618 = vmatpush1.msra.mxu0 0.0
    %619 = vmatprep.subr.mxu0 0.0
    %620 = vmatpush1.msra.mxu0 0.0
    %621 = vmatprep.subr.mxu0 0.0
    %622 = vmatpush1.msra.mxu0 0.0
    %623 = vmatprep.subr.mxu0 0.0
    %624 = vmatpush1.msra.mxu0 0.0
    %625 = vmatprep.subr.mxu0 0.0
    %626 = vmatpush1.msra.mxu0 0.0
    %627 = vmatprep.subr.mxu0 0.0
    %628 = vmatpush1.msra.mxu0 0.0
    %629 = vmatprep.subr.mxu0 0.0
    %630 = vmatpush1.msra.mxu0 0.0
    %631 = vmatprep.subr.mxu0 0.0
    %632 = vmatpush1.msra.mxu0 0.0
    %633 = vmatprep.subr.mxu0 0.0
    %634 = vmatpush1.msra.mxu0 0.0
    %635 = vmatprep.subr.mxu0 0.0
    %636 = vmatpush1.msra.mxu0 0.0
    %637 = vmatprep.subr.mxu0 0.0
    %638 = vmatpush1.msra.mxu0 0.0
    %639 = vmatprep.subr.mxu0 0.0
    %640 = vmatpush1.msra.mxu0 0.0
    %641 = vmatprep.subr.mxu0 0.0
    %642 = vmatpush1.msra.mxu0 0.0
    %643 = vmatprep.subr.mxu0 0.0
    %644 = vmatpush1.msra.mxu0 0.0
    %645 = vmatprep.subr.mxu0 0.0
    %646 = vmatpush1.msra.mxu0 0.0
    %647 = vmatprep.subr.mxu0 0.0
    %648 = vmatpush1.msra.mxu0 0.0
    %649 = vmatprep.subr.mxu0 0.0
    %650 = vmatpush1.msra.mxu0 0.0
    %651 = vmatprep.subr.mxu0 0.0
    %652 = vmatpush1.msra.mxu0 0.0
    %653 = vmatprep.subr.mxu0 0.0
    %654 = vmatpush1.msra.mxu0 0.0
    %655 = vmatprep.mubr.f32.mxu0 0.0
    %656 = vmatmul.mubr.f32.gmra.mrb[0].mxu0 %v589
    %v657 = vpop.f32.mrb[0].mxu0
    %v658 = vadd.f32 0.0, %v657
    %v659 = vpop.f32.mrb[0].mxu0
    %660 = vdwg.mxu0
    %v665 = vsel %vm583, %v508, %v501
    %v666 = vsel %vm585, %v515, %v665
    %v667 = vsel %vm587, %v522, %v666
    %v668 = vsel %vm146, %v667, 0
    %670 = vmatprep.subr.mxu0 0.0
    %671 = vmatpush1.msra.mxu0 %v523
    %672 = vmatprep.subr.mxu0 0.0
    %673 = vmatpush1.msra.mxu0 %v524
    %674 = vmatprep.subr.mxu0 0.0
    %675 = vmatpush1.msra.mxu0 %v525
    %676 = vmatprep.subr.mxu0 0.0
    %677 = vmatpush1.msra.mxu0 %v526
    %678 = vmatprep.subr.mxu0 0.0
    %679 = vmatpush1.msra.mxu0 0.0
    %680 = vmatprep.subr.mxu0 0.0
    %681 = vmatpush1.msra.mxu0 0.0
    %682 = vmatprep.subr.mxu0 0.0
    %683 = vmatpush1.msra.mxu0 0.0
    %684 = vmatprep.subr.mxu0 0.0
    %685 = vmatpush1.msra.mxu0 0.0
    %686 = vmatprep.subr.mxu0 0.0
    %687 = vmatpush1.msra.mxu0 0.0
    %688 = vmatprep.subr.mxu0 0.0
    %689 = vmatpush1.msra.mxu0 0.0
    %690 = vmatprep.subr.mxu0 0.0
    %691 = vmatpush1.msra.mxu0 0.0
    %692 = vmatprep.subr.mxu0 0.0
    %693 = vmatpush1.msra.mxu0 0.0
    %694 = vmatprep.subr.mxu0 0.0
    %695 = vmatpush1.msra.mxu0 0.0
    %696 = vmatprep.subr.mxu0 0.0
    %697 = vmatpush1.msra.mxu0 0.0
    %698 = vmatprep.subr.mxu0 0.0
    %699 = vmatpush1.msra.mxu0 0.0
    %700 = vmatprep.subr.mxu0 0.0
    %701 = vmatpush1.msra.mxu0 0.0
    %702 = vmatprep.subr.mxu0 0.0
    %703 = vmatpush1.msra.mxu0 0.0
    %704 = vmatprep.subr.mxu0 0.0
    %705 = vmatpush1.msra.mxu0 0.0
    %706 = vmatprep.subr.mxu0 0.0
    %707 = vmatpush1.msra.mxu0 0.0
    %708 = vmatprep.subr.mxu0 0.0
    %709 = vmatpush1.msra.mxu0 0.0
    %710 = vmatprep.subr.mxu0 0.0
    %711 = vmatpush1.msra.mxu0 0.0
    %712 = vmatprep.subr.mxu0 0.0
    %713 = vmatpush1.msra.mxu0 0.0
    %714 = vmatprep.subr.mxu0 0.0
    %715 = vmatpush1.msra.mxu0 0.0
    %716 = vmatprep.subr.mxu0 0.0
    %717 = vmatpush1.msra.mxu0 0.0
    %718 = vmatprep.subr.mxu0 0.0
    %719 = vmatpush1.msra.mxu0 0.0
    %720 = vmatprep.subr.mxu0 0.0
    %721 = vmatpush1.msra.mxu0 0.0
    %722 = vmatprep.subr.mxu0 0.0
    %723 = vmatpush1.msra.mxu0 0.0
    %724 = vmatprep.subr.mxu0 0.0
    %725 = vmatpush1.msra.mxu0 0.0
    %726 = vmatprep.subr.mxu0 0.0
    %727 = vmatpush1.msra.mxu0 0.0
    %728 = vmatprep.subr.mxu0 0.0
    %729 = vmatpush1.msra.mxu0 0.0
    %730 = vmatprep.subr.mxu0 0.0
    %731 = vmatpush1.msra.mxu0 0.0
    %732 = vmatprep.subr.mxu0 0.0
    %733 = vmatpush1.msra.mxu0 0.0
    %734 = vmatprep.mubr.f32.mxu0 0.0
    %735 = vmatmul.mubr.f32.gmra.mrb[0].mxu0 %v668
    %v736 = vpop.f32.mrb[0].mxu0
    %v737 = vadd.f32 %v658, %v736
    %v738 = vpop.f32.mrb[0].mxu0
    %739 = vdwg.mxu0
    %v740 = vld [vmem:[#allocation14] sm:$0x1]
    %v742 = vlaneseq
    %v743 = vshrl.u32 %v742, 7
    %v744 = vsub.s32 0, %v743
    %v745 = vrot.slane %v740, %v744
    %v747 = vadd.f32 %v737, %v745
    %748 = vst [vmem:[#allocation16] sm:$0xf] %v747
    // Predicated region
    $region66: #{tpu_custom_call.1} parent=1 // pred_check
      _
    $region67: #{tpu_custom_call.1} parent=1 // pred_check_branch
      %750 = sbr.rel (0) target = $region69
    $region68: #{tpu_custom_call.1} parent=1 // pred_region
      %s752 = ssub.s32 64, 64
      %753 = vsyncadd [#allocation4], %s752
      %s755 = sshll.u32 [#allocation16], 4
      %s756 = int_to_ptr.vmem [resolvable:$true] %s755
      %758 = dma.vmem_to_hbm [thread:$0]  %s756, 64, %s8, [#allocation4]
    $region69: #{tpu_custom_call.1} parent=1 // pred_fallthru
      _
    // Predicated region
    $region70: #{tpu_custom_call.1} parent=1 // pred_check
      _
    $region71: #{tpu_custom_call.1} parent=1 // pred_check_branch
      %760 = sbr.rel (0) target = $region73
    $region72: #{tpu_custom_call.1} parent=1 // pred_region
      %761 = dma.done [#allocation4], 64
    $region73: #{tpu_custom_call.1} parent=1 // pred_fallthru
      _
    %762 = vsyncpa [#allocation3], 1
    %763 = vsyncpa [#allocation6], 1
    %764 = vsyncpa [#allocation9], 1
    %765 = vsyncpa [#allocation12], 1
    %766 = vsyncpa [#allocation15], 1
    %767 = vsyncpa [#allocation4], 1

</llo_original>
